<compile_context>
chip_gen: v7x
topology: tpu7x:2x2x1
jax: 0.10.0
libtpu: 0.0.40
codegen_flags: <defaults>
</compile_context>

<pallas_src>
import numpy as np
import jax
import jax.numpy as jnp
from jax.experimental import pallas as pl
from jax.experimental.pallas import tpu as pltpu


def _interp_matrix_np(n_in: int, n_out: int) -> np.ndarray:
    """Row-interp matrix matching torch bilinear upsample, align_corners=True."""
    i = np.arange(n_out, dtype=np.float64)
    if n_out > 1:
        src = i * (n_in - 1) / (n_out - 1)
    else:
        src = np.zeros_like(i)
    lo = np.clip(np.floor(src).astype(np.int64), 0, n_in - 1)
    hi = np.clip(lo + 1, 0, n_in - 1)
    frac = src - lo
    a = np.zeros((n_out, n_in), dtype=np.float64)
    rows = np.arange(n_out)
    a[rows, lo] += 1.0 - frac
    a[rows, hi] += frac
    return a.astype(np.float32)


def _upsample_conv_kernel(x_ref, kwa_ref, awt_ref, b_ref, o_ref):
    # x_ref  : (C_in*H, W)           f32  one batch element (H on sublanes, W on lanes)
    # kwa_ref: (C_out*H_out, C_in*H) f32  fused kron(conv_w, A_h): H-upsample + 1x1 conv
    # awt_ref: (W, W_out)            f32  A_w^T (W-upsample, right-multiply)
    # b_ref  : (C_out*H_out, 1)      f32  conv bias repeated over H_out rows
    # o_ref  : (C_out*H_out, W_out)  f32
    u = jnp.dot(kwa_ref[...], x_ref[...],
                preferred_element_type=jnp.float32)          # (C_out*H_out, W)
    o_ref[...] = jnp.dot(u, awt_ref[...],
                         preferred_element_type=jnp.float32) + b_ref[...]


def make_upsample_bilinear(conv_w, conv_b, H, W, scale_factor=2):
    """Precompute fused weights once (module init) and return a jitted forward.

    conv_w: (C_out, C_in) 1x1-conv weight; conv_b: (C_out,) bias.
    forward(x): x (N, C_in, H, W) f32 -> (N, C_out, H*s, W*s) f32.
    """
    C_out, C_in = conv_w.shape
    H_out, W_out = H * scale_factor, W * scale_factor

    ah = _interp_matrix_np(H, H_out)                         # (H_out, H)
    aw = _interp_matrix_np(W, W_out)                         # (W_out, W)
    w_np = np.asarray(conv_w, dtype=np.float32)
    b_np = np.asarray(conv_b, dtype=np.float32)

    # Fused (1x1 conv ⊗ H-interp) operand and bias column, built on host once.
    kwa = jnp.asarray(np.kron(w_np, ah))                     # (C_out*H_out, C_in*H)
    awt = jnp.asarray(aw.T)                                  # (W, W_out)
    b_col = jnp.asarray(np.repeat(b_np, H_out)[:, None])     # (C_out*H_out, 1)

    @jax.jit
    def forward(x):
        N = x.shape[0]
        # Free metadata reshape: NCHW -> (N, C_in*H, W); keep f32 end-to-end.
        x3 = x.reshape(N, C_in * H, W).astype(jnp.float32)

        grid_spec = pltpu.PrefetchScalarGridSpec(
            num_scalar_prefetch=0,
            grid=(N,),                                       # one batch element per step
            in_specs=[
                pl.BlockSpec((None, C_in * H, W), lambda n: (n, 0, 0)),
                pl.BlockSpec((C_out * H_out, C_in * H), lambda n: (0, 0)),
                pl.BlockSpec((W, W_out), lambda n: (0, 0)),
                pl.BlockSpec((C_out * H_out, 1), lambda n: (0, 0)),
            ],
            out_specs=pl.BlockSpec((None, C_out * H_out, W_out),
                                   lambda n: (n, 0, 0)),
        )

        out = pl.pallas_call(
            _upsample_conv_kernel,
            out_shape=jax.ShapeDtypeStruct((N, C_out * H_out, W_out), jnp.float32),
            grid_spec=grid_spec,
            compiler_params=pltpu.CompilerParams(
                dimension_semantics=("parallel",)),          # v7x: shard batch over 2 TCs
        )(x3, kwa, awt, b_col)

        # Free metadata reshape back to NCHW.
        return out.reshape(N, C_out, H_out, W_out)

    return forward


if __name__ == "__main__":
    # Module config: UpSample(ch_in=4, ch_out=8, scale_factor=2, mode='bilinear')
    N, C_in, H, W = 2, 4, 16, 16
    C_out, scale = 8, 2

    key = jax.random.PRNGKey(0)
    kx, kw, kb = jax.random.split(key, 3)

    x = jax.random.normal(kx, (N, C_in, H, W), dtype=jnp.float32)
    # 1x1 conv: weight (C_out, C_in, 1, 1) collapses to (C_out, C_in).
    conv_w = jax.random.normal(kw, (C_out, C_in), dtype=jnp.float32) * 0.1
    conv_b = jax.random.normal(kb, (C_out,), dtype=jnp.float32) * 0.1

    fwd = make_upsample_bilinear(conv_w, conv_b, H, W, scale_factor=scale)
    y = jax.block_until_ready(fwd(x))
    assert y.shape == (N, C_out, H * scale, W * scale)

    # f32 reference (high-precision einsums) — tighter tolerance than before,
    # since the kernel path is f32 end-to-end.
    ah = jnp.asarray(_interp_matrix_np(H, H * scale))
    aw = jnp.asarray(_interp_matrix_np(W, W * scale))
    up_ref = jnp.einsum('oh,nchw,pw->ncop', ah, x, aw,
                        precision=jax.lax.Precision.HIGHEST)
    y_ref = jnp.einsum('kc,ncop->nkop', conv_w, up_ref,
                       precision=jax.lax.Precision.HIGHEST) \
            + conv_b[None, :, None, None]
    assert bool(jnp.allclose(y, y_ref, atol=1e-2, rtol=1e-2))

    print("KERNEL_OK")
</pallas_src>

<mosaic_0001>
module attributes {stable_mosaic.version = 11 : i64} {
  func.func @_upsample_conv_kernel(%arg0: i32, %arg1: memref<1x64x16xf32, #tpu.memory_space<vmem>>, %arg2: memref<256x64xf32, #tpu.memory_space<vmem>>, %arg3: memref<16x32xf32, #tpu.memory_space<vmem>>, %arg4: memref<256x1xf32, #tpu.memory_space<vmem>>, %arg5: memref<1x256x32xf32, #tpu.memory_space<vmem>>) attributes {dimension_semantics = [#tpu.dimension_semantics<parallel>], iteration_bounds = array<i64: 2>, scalar_prefetch = 0 : i64, scratch_operands = 0 : i64, tpu.core_type = #tpu.core_type<tc>, window_params = [{transform_indices = @transform_0, window_bounds = array<i64: 1, 64, 16>}, {pipeline_mode = #tpu.pipeline_mode<synchronous>, transform_indices = @transform_1, window_bounds = array<i64: 256, 64>}, {pipeline_mode = #tpu.pipeline_mode<synchronous>, transform_indices = @transform_2, window_bounds = array<i64: 16, 32>}, {pipeline_mode = #tpu.pipeline_mode<synchronous>, transform_indices = @transform_3, window_bounds = array<i64: 256, 1>}, {transform_indices = @transform_4, window_bounds = array<i64: 1, 256, 32>}]} {
    %c0 = arith.constant 0 : index
    %c0_0 = arith.constant 0 : index
    %0 = vector.load %arg2[%c0, %c0_0] : memref<256x64xf32, #tpu.memory_space<vmem>>, vector<256x64xf32>
    %c0_1 = arith.constant 0 : index
    %c0_2 = arith.constant 0 : index
    %c0_3 = arith.constant 0 : index
    %1 = vector.load %arg1[%c0_1, %c0_2, %c0_3] : memref<1x64x16xf32, #tpu.memory_space<vmem>>, vector<1x64x16xf32>
    %2 = vector.shape_cast %1 : vector<1x64x16xf32> to vector<64x16xf32>
    %cst = arith.constant dense<0.000000e+00> : vector<256x16xf32>
    %3 = tpu.matmul %0, %2, %cst {dimension_numbers = #tpu.dot_dimension_numbers<[1], [0], [0], [1], [0, 0, 1, 1], [], []>} : vector<256x64xf32>, vector<64x16xf32>, vector<256x16xf32> -> vector<256x16xf32>
    %c0_4 = arith.constant 0 : index
    %c0_5 = arith.constant 0 : index
    %4 = vector.load %arg3[%c0_4, %c0_5] : memref<16x32xf32, #tpu.memory_space<vmem>>, vector<16x32xf32>
    %cst_6 = arith.constant dense<0.000000e+00> : vector<256x32xf32>
    %5 = tpu.matmul %3, %4, %cst_6 {dimension_numbers = #tpu.dot_dimension_numbers<[1], [0], [0], [1], [0, 0, 1, 1], [], []>} : vector<256x16xf32>, vector<16x32xf32>, vector<256x32xf32> -> vector<256x32xf32>
    %c0_7 = arith.constant 0 : index
    %c0_8 = arith.constant 0 : index
    %6 = vector.load %arg4[%c0_7, %c0_8] : memref<256x1xf32, #tpu.memory_space<vmem>>, vector<256x1xf32>
    %7 = vector.broadcast %6 : vector<256x1xf32> to vector<256x32xf32>
    %8 = arith.addf %5, %7 : vector<256x32xf32>
    %c0_9 = arith.constant 0 : index
    %c0_10 = arith.constant 0 : index
    %c0_11 = arith.constant 0 : index
    %9 = vector.load %arg5[%c0_9, %c0_10, %c0_11] : memref<1x256x32xf32, #tpu.memory_space<vmem>>, vector<1x256x32xf32>
    %10 = vector.shape_cast %9 : vector<1x256x32xf32> to vector<256x32xf32>
    %11 = vector.shape_cast %8 : vector<256x32xf32> to vector<1x256x32xf32>
    tpu.vector_store %arg5[%c0_9, %c0_10, %c0_11], %11 {strides = array<i32>} : memref<1x256x32xf32, #tpu.memory_space<vmem>>, vector<1x256x32xf32>,
    return
  }
  func.func @transform_0(%arg0: i32) -> (i32, i32, i32) {
    %c0_i32 = arith.constant 0 : i32
    %c0_i32_0 = arith.constant 0 : i32
    %c0_i32_1 = arith.constant 0 : i32
    return %arg0, %c0_i32, %c0_i32_0 : i32, i32, i32
  }
  func.func @transform_1(%arg0: i32) -> (i32, i32) {
    %c0_i32 = arith.constant 0 : i32
    %c0_i32_0 = arith.constant 0 : i32
    %c0_i32_1 = arith.constant 0 : i32
    return %c0_i32, %c0_i32_0 : i32, i32
  }
  func.func @transform_2(%arg0: i32) -> (i32, i32) {
    %c0_i32 = arith.constant 0 : i32
    %c0_i32_0 = arith.constant 0 : i32
    %c0_i32_1 = arith.constant 0 : i32
    return %c0_i32, %c0_i32_0 : i32, i32
  }
  func.func @transform_3(%arg0: i32) -> (i32, i32) {
    %c0_i32 = arith.constant 0 : i32
    %c0_i32_0 = arith.constant 0 : i32
    %c0_i32_1 = arith.constant 0 : i32
    return %c0_i32, %c0_i32_0 : i32, i32
  }
  func.func @transform_4(%arg0: i32) -> (i32, i32, i32) {
    %c0_i32 = arith.constant 0 : i32
    %c0_i32_0 = arith.constant 0 : i32
    %c0_i32_1 = arith.constant 0 : i32
    return %arg0, %c0_i32, %c0_i32_0 : i32, i32, i32
  }
}

</mosaic_0001>

<llo_original>
// kernel: forward.1
$region0: #{forward.1}
  #allocation0 [shape = 'u32[]', space=smem, size = 0x4, offset = 0x4, fixed_abs, tag = 'smem constant byte address 0x4 - core index']
  #allocation1 [shape = 'u32[144,128]{1,0:T(1,128)}', space=vmem, size = 0x12000, scoped, tag = 'internal scratch']
  %s0 = inlined_call_operand.hbm [shape: f32[2,64,16], index: 0, kind: input, shape index: {}]
  %s1 = inlined_call_operand.hbm [shape: f32[256,64], index: 1, kind: input, shape index: {}]
  %s2 = inlined_call_operand.hbm [shape: f32[16,32], index: 2, kind: input, shape index: {}]
  %s3 = inlined_call_operand.hbm [shape: f32[256,1], index: 3, kind: input, shape index: {}]
  %s4 = inlined_call_operand.hbm [shape: f32[2,256,32], index: 4, kind: output, shape index: {}]
  %s5 = sld [smem:[#allocation0]]
  $region65: #{forward.1} parent=0
    _
  %s7 = ssub.s32 1, %s5
  %s8 = scalar_select 0, %s7, %s5
  $region1: #{forward.1} parent=0
    #allocation2 [shape = 'u8[65536]{0}', space=vmem, size = 0x10000, scoped, tag = 'input window, operand 0']
    #allocation3 [shape = 's32[2]{0}', space=sflag, size = 0x8, scoped, tag = 'scoped memory for forward.1']
    #allocation4 [shape = 's32[2]{0}', space=sflag, size = 0x8, scoped, tag = 'scoped memory for forward.1']
    #allocation5 [shape = 'u8[131072]{0}', space=vmem, size = 0x20000, scoped, tag = 'input window, operand 1, single buffered']
    #allocation6 [shape = 's32[1]{0}', space=sflag, size = 0x4, scoped, tag = 'scoped memory for forward.1']
    #allocation7 [shape = 'u8[8192]{0}', space=vmem, size = 0x2000, scoped, tag = 'input window, operand 2, single buffered']
    #allocation8 [shape = 'u8[131072]{0}', space=vmem, size = 0x20000, scoped, tag = 'input window, operand 3, single buffered']
    #allocation9 [shape = 's32[1]{0}', space=sflag, size = 0x4, scoped, tag = 'scoped memory for forward.1']
    #allocation10 [shape = 'u8[262144]{0}', space=vmem, size = 0x40000, scoped, tag = 'output window, operand 0']
    %9 = vsyncpa [#allocation3], 0
    %s10 = scalar_lea.sflag [#allocation3], 1
    %11 = vsyncpa %s10, 0
    %12 = vsyncpa [#allocation6], 0
    %13 = vsyncpa [#allocation9], 0
    %14 = vsyncpa [#allocation4], 0
    %s15 = scalar_lea.sflag [#allocation4], 1
    %16 = vsyncpa %s15, 0
    loop: start=0, step=1, limit=4
    $region2: #{forward.1} parent=1 // loop_pre_header
      _
    $region3: #{forward.1} parent=1 // loop_header
      %s18 = sphi 0, %s22
      %p19 = scmp.ge.s32.totalorder %s18, 4
      %s28 = sphi 0, %s30
      %s31 = sphi 0, %s28
      %s32 = sphi 0, %s31
      %s48 = sphi 0, %s32
      %s52 = sphi 0, %s52
      %s54 = sphi 0, %s52
      %s55 = sphi 0, %s54
      %s69 = sphi 0, %s55
      %s73 = sphi 0, %s73
      %s75 = sphi 0, %s73
      %s76 = sphi 0, %s75
      %s90 = sphi 0, %s76
      %s94 = sphi 0, %s94
      %s96 = sphi 0, %s94
      %s97 = sphi 0, %s96
      %s111 = sphi 0, %s97
      %s117 = sphi 0, %s119
      %s120 = sphi 0, %s117
      %s121 = sphi 0, %s120
      %s137 = sphi 0, %s121
    $region4: #{forward.1} parent=1 // loop_header_branch
      %21 = sbr.rel (%p19) target = $region8
    $region5: #{forward.1} parent=1 // loop_body
      %s23 = ssub.s32 %s18, 1
      %s24 = ssub.s32 %s18, 2
      %s25 = sadd.s32 %s18, 1
      %s26 = ssub.s32 %s18, %s25
      %p27 = scmp.eq.s32.totalorder %s26, 0
      %s29 = sadd.s32 %s28, 1
      %s30 = scalar_select %p27, %s28, %s29
      %p33 = pneg %p27
      %p34 = scmp.eq.s32.totalorder %s18, 1
      %p35 = por %p33, %p34
      %p36 = scmp.ne.s32.totalorder %s28, %s31
      %p37 = scmp.eq.s32.totalorder %s18, 0
      %p38 = por %p36, %p37
      %p39 = scmp.ne.s32.totalorder %s28, %s31
      %p40 = scmp.eq.s32.totalorder %s23, 1
      %p41 = por %p39, %p40
      %p42 = scmp.ne.s32.totalorder %s31, %s32
      %p43 = scmp.eq.s32.totalorder %s23, 0
      %p44 = por %p42, %p43
      %p45 = scmp.ne.s32.totalorder %s31, %s32
      %p46 = scmp.eq.s32.totalorder %s24, 1
      %p47 = por %p45, %p46
      %p49 = scmp.ne.s32.totalorder %s32, %s48
      %p50 = scmp.eq.s32.totalorder %s24, 0
      %p51 = por %p49, %p50
      %s53 = sadd.s32 %s52, 1
      %p56 = scmp.eq.s32.totalorder %s18, 1
      %p57 = scmp.ne.s32.totalorder %s52, %s54
      %p58 = scmp.eq.s32.totalorder %s18, 0
      %p59 = por %p57, %p58
      %p60 = scmp.ne.s32.totalorder %s52, %s54
      %p61 = scmp.eq.s32.totalorder %s23, 1
      %p62 = por %p60, %p61
      %p63 = scmp.ne.s32.totalorder %s54, %s55
      %p64 = scmp.eq.s32.totalorder %s23, 0
      %p65 = por %p63, %p64
      %p66 = scmp.ne.s32.totalorder %s54, %s55
      %p67 = scmp.eq.s32.totalorder %s24, 1
      %p68 = por %p66, %p67
      %p70 = scmp.ne.s32.totalorder %s55, %s69
      %p71 = scmp.eq.s32.totalorder %s24, 0
      %p72 = por %p70, %p71
      %s74 = sadd.s32 %s73, 1
      %p77 = scmp.eq.s32.totalorder %s18, 1
      %p78 = scmp.ne.s32.totalorder %s73, %s75
      %p79 = scmp.eq.s32.totalorder %s18, 0
      %p80 = por %p78, %p79
      %p81 = scmp.ne.s32.totalorder %s73, %s75
      %p82 = scmp.eq.s32.totalorder %s23, 1
      %p83 = por %p81, %p82
      %p84 = scmp.ne.s32.totalorder %s75, %s76
      %p85 = scmp.eq.s32.totalorder %s23, 0
      %p86 = por %p84, %p85
      %p87 = scmp.ne.s32.totalorder %s75, %s76
      %p88 = scmp.eq.s32.totalorder %s24, 1
      %p89 = por %p87, %p88
      %p91 = scmp.ne.s32.totalorder %s76, %s90
      %p92 = scmp.eq.s32.totalorder %s24, 0
      %p93 = por %p91, %p92
      %s95 = sadd.s32 %s94, 1
      %p98 = scmp.eq.s32.totalorder %s18, 1
      %p99 = scmp.ne.s32.totalorder %s94, %s96
      %p100 = scmp.eq.s32.totalorder %s18, 0
      %p101 = por %p99, %p100
      %p102 = scmp.ne.s32.totalorder %s94, %s96
      %p103 = scmp.eq.s32.totalorder %s23, 1
      %p104 = por %p102, %p103
      %p105 = scmp.ne.s32.totalorder %s96, %s97
      %p106 = scmp.eq.s32.totalorder %s23, 0
      %p107 = por %p105, %p106
      %p108 = scmp.ne.s32.totalorder %s96, %s97
      %p109 = scmp.eq.s32.totalorder %s24, 1
      %p110 = por %p108, %p109
      %p112 = scmp.ne.s32.totalorder %s97, %s111
      %p113 = scmp.eq.s32.totalorder %s24, 0
      %p114 = por %p112, %p113
      %s115 = ssub.s32 %s18, %s25
      %p116 = scmp.eq.s32.totalorder %s115, 0
      %s118 = sadd.s32 %s117, 1
      %s119 = scalar_select %p116, %s117, %s118
      %p122 = pneg %p116
      %p123 = scmp.eq.s32.totalorder %s18, 1
      %p124 = por %p122, %p123
      %p125 = scmp.ne.s32.totalorder %s117, %s120
      %p126 = scmp.eq.s32.totalorder %s18, 0
      %p127 = por %p125, %p126
      %p128 = scmp.ne.s32.totalorder %s117, %s120
      %p129 = scmp.eq.s32.totalorder %s23, 1
      %p130 = por %p128, %p129
      %p131 = scmp.ne.s32.totalorder %s120, %s121
      %p132 = scmp.eq.s32.totalorder %s23, 0
      %p133 = por %p131, %p132
      %p134 = scmp.ne.s32.totalorder %s120, %s121
      %p135 = scmp.eq.s32.totalorder %s24, 1
      %p136 = por %p134, %p135
      %p138 = scmp.ne.s32.totalorder %s121, %s137
      %p139 = scmp.eq.s32.totalorder %s24, 0
      %p140 = por %p138, %p139
      %p141 = scmp.le.s32.totalorder 1, %s18
      %p142 = scmp.lt.s32.totalorder %s18, 3
      %p143 = pnand %p141, %p142
      %p144 = pneg %p143
      // Predicated region
      $region9: #{forward.1} parent=5 // pred_check
        _
      $region10: #{forward.1} parent=5 // pred_check_branch
        %146 = sbr.rel (%p143) target = $region12
      $region11: #{forward.1} parent=5 // pred_region
        %s147 = ssub.s32 %s18, 1
        // Predicated region
        $region13: #{forward.1} parent=11 // pred_check
          %p148 = pneg %p65
        $region14: #{forward.1} parent=11 // pred_check_branch
          %150 = sbr.rel (%p148) target = $region16
        $region15: #{forward.1} parent=11 // pred_region
          %s152 = ssub.s32 4096, 4096
          %153 = vsyncadd [#allocation6], %s152
          %s154 = sshll.u32 [#allocation5], 4
          %s155 = int_to_ptr.vmem [resolvable:$true] %s154
          %160 = dma.hbm_to_vmem [thread:$0]  %s1, 4096, %s155, [#allocation6], 128, 128, 8
        $region16: #{forward.1} parent=11 // pred_fallthru
          _
        // Predicated region
        $region17: #{forward.1} parent=11 // pred_check
          %p161 = pneg %p86
        $region18: #{forward.1} parent=11 // pred_check_branch
          %163 = sbr.rel (%p161) target = $region20
        $region19: #{forward.1} parent=11 // pred_region
          %s165 = ssub.s32 256, 256
          %166 = vsyncadd [#allocation6], %s165
          %s167 = sshll.u32 [#allocation7], 4
          %s168 = int_to_ptr.vmem [resolvable:$true] %s167
          %173 = dma.hbm_to_vmem [thread:$0]  %s2, 256, %s168, [#allocation6], 128, 128, 8
        $region20: #{forward.1} parent=11 // pred_fallthru
          _
        // Predicated region
        $region21: #{forward.1} parent=11 // pred_check
          %p174 = pneg %p107
        $region22: #{forward.1} parent=11 // pred_check_branch
          %176 = sbr.rel (%p174) target = $region24
        $region23: #{forward.1} parent=11 // pred_region
          %s178 = ssub.s32 4096, 4096
          %179 = vsyncadd [#allocation9], %s178
          %s180 = sshll.u32 [#allocation8], 4
          %s181 = int_to_ptr.vmem [resolvable:$true] %s180
          %186 = dma.hbm_to_vmem [thread:$0]  %s3, 4096, %s181, [#allocation9], 128, 128, 8
        $region24: #{forward.1} parent=11 // pred_fallthru
          _
      $region12: #{forward.1} parent=5 // pred_fallthru
        _
      %p187 = scmp.lt.s32.totalorder %s18, 2
      // Predicated region
      $region25: #{forward.1} parent=5 // pred_check
        %p188 = pneg %p187
      $region26: #{forward.1} parent=5 // pred_check_branch
        %190 = sbr.rel (%p188) target = $region28
      $region27: #{forward.1} parent=5 // pred_region
        // Predicated region
        $region29: #{forward.1} parent=27 // pred_check
          %p191 = pneg %p38
        $region30: #{forward.1} parent=27 // pred_check_branch
          %193 = sbr.rel (%p191) target = $region32
        $region31: #{forward.1} parent=27 // pred_region
          %s194 = sand.u32 %s28, 1
          %s195 = scalar_lea.sflag [#allocation3], %s194
          %s196 = sand.u32 %s28, 1
          %s197 = smul.addr %s196, 64
          %s198 = scalar_lea.vmem [#allocation2], %s197
          %s200 = ssub.s32 1024, 1024
          %201 = vsyncadd %s195, %s200
          %s202 = smul.addr %s18, 8
          %s203 = smul.addr %s202, 128
          %s204 = scalar_lea.hbm %s0, %s203
          %s205 = sshll.u32 %s198, 4
          %s206 = int_to_ptr.vmem [resolvable:$true] %s205
          %211 = dma.hbm_to_vmem [thread:$0]  %s204, 1024, %s206, %s195, 128, 128, 8
        $region32: #{forward.1} parent=27 // pred_fallthru
          _
      $region28: #{forward.1} parent=5 // pred_fallthru
        _
      %p212 = scmp.le.s32.totalorder 1, %s18
      %p213 = scmp.lt.s32.totalorder %s18, 3
      %p214 = pnand %p212, %p213
      %p215 = pneg %p214
      // Predicated region
      $region33: #{forward.1} parent=5 // pred_check
        _
      $region34: #{forward.1} parent=5 // pred_check_branch
        %217 = sbr.rel (%p214) target = $region36
      $region35: #{forward.1} parent=5 // pred_region
        %s218 = ssub.s32 %s18, 1
        %s219 = sand.u32 %s31, 1
        %s220 = scalar_lea.sflag [#allocation3], %s219
        %s221 = sand.u32 %s31, 1
        %s222 = smul.addr %s221, 64
        %s223 = scalar_lea.vmem [#allocation2], %s222
        // Predicated region
        $region37: #{forward.1} parent=35 // pred_check
          %p224 = pneg %p44
        $region38: #{forward.1} parent=35 // pred_check_branch
          %226 = sbr.rel (%p224) target = $region40
        $region39: #{forward.1} parent=35 // pred_region
          %227 = dma.done %s220, 1024
        $region40: #{forward.1} parent=35 // pred_fallthru
          _
        // Predicated region
        $region41: #{forward.1} parent=35 // pred_check
          %p228 = pneg %p65
        $region42: #{forward.1} parent=35 // pred_check_branch
          %230 = sbr.rel (%p228) target = $region44
        $region43: #{forward.1} parent=35 // pred_region
          %231 = dma.done [#allocation6], 4096
        $region44: #{forward.1} parent=35 // pred_fallthru
          _
        // Predicated region
        $region45: #{forward.1} parent=35 // pred_check
          %p232 = pneg %p86
        $region46: #{forward.1} parent=35 // pred_check_branch
          %234 = sbr.rel (%p232) target = $region48
        $region47: #{forward.1} parent=35 // pred_region
          %235 = dma.done [#allocation6], 256
        $region48: #{forward.1} parent=35 // pred_fallthru
          _
        // Predicated region
        $region49: #{forward.1} parent=35 // pred_check
          %p236 = pneg %p107
        $region50: #{forward.1} parent=35 // pred_check_branch
          %238 = sbr.rel (%p236) target = $region52
        $region51: #{forward.1} parent=35 // pred_region
          %239 = dma.done [#allocation9], 4096
        $region52: #{forward.1} parent=35 // pred_fallthru
          _
        %s240 = sand.u32 %s31, 1
        %s241 = scalar_lea.sflag [#allocation3], %s240
        %s242 = sand.u32 %s31, 1
        %s243 = smul.addr %s242, 64
        %s244 = scalar_lea.vmem [#allocation2], %s243
        %p245 = pneg %p44
        %p246 = pneg %p41
        %p247 = pneg %p65
        %p248 = pneg %p62
        %p249 = pneg %p86
        %p250 = pneg %p83
        %p251 = pneg %p107
        %p252 = pneg %p104
        %p253 = pneg %p133
        %p254 = pneg %p130
        %s255 = sand.u32 %s120, 1
        %s256 = scalar_lea.sflag [#allocation4], %s255
        %s257 = sand.u32 %s120, 1
        %s258 = smul.addr %s257, 256
        %s259 = scalar_lea.vmem [#allocation10], %s258
        %v260 = vld [vmem:[#allocation5] sm:$0xff]
        %v261 = vld [vmem:[#allocation5 + $0x8] sm:$0xff]
        %v262 = vld [vmem:[#allocation5 + $0x10] sm:$0xff]
        %v263 = vld [vmem:[#allocation5 + $0x18] sm:$0xff]
        %v264 = vld [vmem:[#allocation5 + $0x20] sm:$0xff]
        %v265 = vld [vmem:[#allocation5 + $0x28] sm:$0xff]
        %v266 = vld [vmem:[#allocation5 + $0x30] sm:$0xff]
        %v267 = vld [vmem:[#allocation5 + $0x38] sm:$0xff]
        %v268 = vld [vmem:[#allocation5 + $0x40] sm:$0xff]
        %v269 = vld [vmem:[#allocation5 + $0x48] sm:$0xff]
        %v270 = vld [vmem:[#allocation5 + $0x50] sm:$0xff]
        %v271 = vld [vmem:[#allocation5 + $0x58] sm:$0xff]
        %v272 = vld [vmem:[#allocation5 + $0x60] sm:$0xff]
        %v273 = vld [vmem:[#allocation5 + $0x68] sm:$0xff]
        %v274 = vld [vmem:[#allocation5 + $0x70] sm:$0xff]
        %v275 = vld [vmem:[#allocation5 + $0x78] sm:$0xff]
        %v276 = vld [vmem:[#allocation5 + $0x80] sm:$0xff]
        %v277 = vld [vmem:[#allocation5 + $0x88] sm:$0xff]
        %v278 = vld [vmem:[#allocation5 + $0x90] sm:$0xff]
        %v279 = vld [vmem:[#allocation5 + $0x98] sm:$0xff]
        %v280 = vld [vmem:[#allocation5 + $0xa0] sm:$0xff]
        %v281 = vld [vmem:[#allocation5 + $0xa8] sm:$0xff]
        %v282 = vld [vmem:[#allocation5 + $0xb0] sm:$0xff]
        %v283 = vld [vmem:[#allocation5 + $0xb8] sm:$0xff]
        %v284 = vld [vmem:[#allocation5 + $0xc0] sm:$0xff]
        %v285 = vld [vmem:[#allocation5 + $0xc8] sm:$0xff]
        %v286 = vld [vmem:[#allocation5 + $0xd0] sm:$0xff]
        %v287 = vld [vmem:[#allocation5 + $0xd8] sm:$0xff]
        %v288 = vld [vmem:[#allocation5 + $0xe0] sm:$0xff]
        %v289 = vld [vmem:[#allocation5 + $0xe8] sm:$0xff]
        %v290 = vld [vmem:[#allocation5 + $0xf0] sm:$0xff]
        %v291 = vld [vmem:[#allocation5 + $0xf8] sm:$0xff]
        %v292 = vld [vmem:[%s223] sm:$0xff]
        %v293 = vld [vmem:[%s223 + $0x8] sm:$0xff]
        %v294 = vld [vmem:[%s223 + $0x10] sm:$0xff]
        %v295 = vld [vmem:[%s223 + $0x18] sm:$0xff]
        %v296 = vld [vmem:[%s223 + $0x20] sm:$0xff]
        %v297 = vld [vmem:[%s223 + $0x28] sm:$0xff]
        %v298 = vld [vmem:[%s223 + $0x30] sm:$0xff]
        %v299 = vld [vmem:[%s223 + $0x38] sm:$0xff]
        %vm300 = vcmask 523264
        %v302 = vsel %vm300, %v260, 0
        %v305 = vsel %vm300, %v261, 0
        %v308 = vsel %vm300, %v262, 0
        %v311 = vsel %vm300, %v263, 0
        %v314 = vsel %vm300, %v264, 0
        %v317 = vsel %vm300, %v265, 0
        %v320 = vsel %vm300, %v266, 0
        %v323 = vsel %vm300, %v267, 0
        %v326 = vsel %vm300, %v268, 0
        %v329 = vsel %vm300, %v269, 0
        %v332 = vsel %vm300, %v270, 0
        %v335 = vsel %vm300, %v271, 0
        %v338 = vsel %vm300, %v272, 0
        %v341 = vsel %vm300, %v273, 0
        %v344 = vsel %vm300, %v274, 0
        %v347 = vsel %vm300, %v275, 0
        %v350 = vsel %vm300, %v276, 0
        %v353 = vsel %vm300, %v277, 0
        %v356 = vsel %vm300, %v278, 0
        %v359 = vsel %vm300, %v279, 0
        %v362 = vsel %vm300, %v280, 0
        %v365 = vsel %vm300, %v281, 0
        %v368 = vsel %vm300, %v282, 0
        %v371 = vsel %vm300, %v283, 0
        %v374 = vsel %vm300, %v284, 0
        %v377 = vsel %vm300, %v285, 0
        %v380 = vsel %vm300, %v286, 0
        %v383 = vsel %vm300, %v287, 0
        %v386 = vsel %vm300, %v288, 0
        %v389 = vsel %vm300, %v289, 0
        %v392 = vsel %vm300, %v290, 0
        %v395 = vsel %vm300, %v291, 0
        %397 = vmatprep.subr.mxu0 0.0
        %398 = vmatpush1.msra.mxu0 %v292
        %399 = vmatprep.subr.mxu0 0.0
        %400 = vmatpush1.msra.mxu0 %v293
        %401 = vmatprep.subr.mxu0 0.0
        %402 = vmatpush1.msra.mxu0 %v294
        %403 = vmatprep.subr.mxu0 0.0
        %404 = vmatpush1.msra.mxu0 %v295
        %405 = vmatprep.subr.mxu0 0.0
        %406 = vmatpush1.msra.mxu0 %v296
        %407 = vmatprep.subr.mxu0 0.0
        %408 = vmatpush1.msra.mxu0 %v297
        %409 = vmatprep.subr.mxu0 0.0
        %410 = vmatpush1.msra.mxu0 %v298
        %411 = vmatprep.subr.mxu0 0.0
        %412 = vmatpush1.msra.mxu0 %v299
        %413 = vmatprep.subr.mxu0 0.0
        %414 = vmatpush1.msra.mxu0 0.0
        %415 = vmatprep.subr.mxu0 0.0
        %416 = vmatpush1.msra.mxu0 0.0
        %417 = vmatprep.subr.mxu0 0.0
        %418 = vmatpush1.msra.mxu0 0.0
        %419 = vmatprep.subr.mxu0 0.0
        %420 = vmatpush1.msra.mxu0 0.0
        %421 = vmatprep.subr.mxu0 0.0
        %422 = vmatpush1.msra.mxu0 0.0
        %423 = vmatprep.subr.mxu0 0.0
        %424 = vmatpush1.msra.mxu0 0.0
        %425 = vmatprep.subr.mxu0 0.0
        %426 = vmatpush1.msra.mxu0 0.0
        %427 = vmatprep.subr.mxu0 0.0
        %428 = vmatpush1.msra.mxu0 0.0
        %429 = vmatprep.subr.mxu0 0.0
        %430 = vmatpush1.msra.mxu0 0.0
        %431 = vmatprep.subr.mxu0 0.0
        %432 = vmatpush1.msra.mxu0 0.0
        %433 = vmatprep.subr.mxu0 0.0
        %434 = vmatpush1.msra.mxu0 0.0
        %435 = vmatprep.subr.mxu0 0.0
        %436 = vmatpush1.msra.mxu0 0.0
        %437 = vmatprep.subr.mxu0 0.0
        %438 = vmatpush1.msra.mxu0 0.0
        %439 = vmatprep.subr.mxu0 0.0
        %440 = vmatpush1.msra.mxu0 0.0
        %441 = vmatprep.subr.mxu0 0.0
        %442 = vmatpush1.msra.mxu0 0.0
        %443 = vmatprep.subr.mxu0 0.0
        %444 = vmatpush1.msra.mxu0 0.0
        %445 = vmatprep.subr.mxu0 0.0
        %446 = vmatpush1.msra.mxu0 0.0
        %447 = vmatprep.subr.mxu0 0.0
        %448 = vmatpush1.msra.mxu0 0.0
        %449 = vmatprep.subr.mxu0 0.0
        %450 = vmatpush1.msra.mxu0 0.0
        %451 = vmatprep.subr.mxu0 0.0
        %452 = vmatpush1.msra.mxu0 0.0
        %453 = vmatprep.subr.mxu0 0.0
        %454 = vmatpush1.msra.mxu0 0.0
        %455 = vmatprep.subr.mxu0 0.0
        %456 = vmatpush1.msra.mxu0 0.0
        %457 = vmatprep.subr.mxu0 0.0
        %458 = vmatpush1.msra.mxu0 0.0
        %459 = vmatprep.subr.mxu0 0.0
        %460 = vmatpush1.msra.mxu0 0.0
        %461 = vmatprep.mubr.f32.mxu0 0.0
        %462 = vmatmul.mubr.f32.gmra.mrb[0].mxu0 %v302
        %v463 = vpop.f32.mrb[0].mxu0
        %v464 = vadd.f32 0.0, %v463
        %v465 = vpop.f32.mrb[0].mxu0
        %466 = vmatprep.mubr.f32.mxu0 0.0
        %467 = vmatmul.mubr.f32.gmra.mrb[0].mxu0 %v305
        %v468 = vpop.f32.mrb[0].mxu0
        %v469 = vadd.f32 0.0, %v468
        %v470 = vpop.f32.mrb[0].mxu0
        %471 = vmatprep.mubr.f32.mxu0 0.0
        %472 = vmatmul.mubr.f32.gmra.mrb[0].mxu0 %v308
        %v473 = vpop.f32.mrb[0].mxu0
        %v474 = vadd.f32 0.0, %v473
        %v475 = vpop.f32.mrb[0].mxu0
        %476 = vmatprep.mubr.f32.mxu0 0.0
        %477 = vmatmul.mubr.f32.gmra.mrb[0].mxu0 %v311
        %v478 = vpop.f32.mrb[0].mxu0
        %v479 = vadd.f32 0.0, %v478
        %v480 = vpop.f32.mrb[0].mxu0
        %481 = vmatprep.mubr.f32.mxu0 0.0
        %482 = vmatmul.mubr.f32.gmra.mrb[0].mxu0 %v314
        %v483 = vpop.f32.mrb[0].mxu0
        %v484 = vadd.f32 0.0, %v483
        %v485 = vpop.f32.mrb[0].mxu0
        %486 = vmatprep.mubr.f32.mxu0 0.0
        %487 = vmatmul.mubr.f32.gmra.mrb[0].mxu0 %v317
        %v488 = vpop.f32.mrb[0].mxu0
        %v489 = vadd.f32 0.0, %v488
        %v490 = vpop.f32.mrb[0].mxu0
        %491 = vmatprep.mubr.f32.mxu0 0.0
        %492 = vmatmul.mubr.f32.gmra.mrb[0].mxu0 %v320
        %v493 = vpop.f32.mrb[0].mxu0
        %v494 = vadd.f32 0.0, %v493
        %v495 = vpop.f32.mrb[0].mxu0
        %496 = vmatprep.mubr.f32.mxu0 0.0
        %497 = vmatmul.mubr.f32.gmra.mrb[0].mxu0 %v323
        %v498 = vpop.f32.mrb[0].mxu0
        %v499 = vadd.f32 0.0, %v498
        %v500 = vpop.f32.mrb[0].mxu0
        %501 = vmatprep.mubr.f32.mxu0 0.0
        %502 = vmatmul.mubr.f32.gmra.mrb[0].mxu0 %v326
        %v503 = vpop.f32.mrb[0].mxu0
        %v504 = vadd.f32 0.0, %v503
        %v505 = vpop.f32.mrb[0].mxu0
        %506 = vmatprep.mubr.f32.mxu0 0.0
        %507 = vmatmul.mubr.f32.gmra.mrb[0].mxu0 %v329
        %v508 = vpop.f32.mrb[0].mxu0
        %v509 = vadd.f32 0.0, %v508
        %v510 = vpop.f32.mrb[0].mxu0
        %511 = vmatprep.mubr.f32.mxu0 0.0
        %512 = vmatmul.mubr.f32.gmra.mrb[0].mxu0 %v332
        %v513 = vpop.f32.mrb[0].mxu0
        %v514 = vadd.f32 0.0, %v513
        %v515 = vpop.f32.mrb[0].mxu0
        %516 = vmatprep.mubr.f32.mxu0 0.0
        %517 = vmatmul.mubr.f32.gmra.mrb[0].mxu0 %v335
        %v518 = vpop.f32.mrb[0].mxu0
        %v519 = vadd.f32 0.0, %v518
        %v520 = vpop.f32.mrb[0].mxu0
        %521 = vmatprep.mubr.f32.mxu0 0.0
        %522 = vmatmul.mubr.f32.gmra.mrb[0].mxu0 %v338
        %v523 = vpop.f32.mrb[0].mxu0
        %v524 = vadd.f32 0.0, %v523
        %v525 = vpop.f32.mrb[0].mxu0
        %526 = vmatprep.mubr.f32.mxu0 0.0
        %527 = vmatmul.mubr.f32.gmra.mrb[0].mxu0 %v341
        %v528 = vpop.f32.mrb[0].mxu0
        %v529 = vadd.f32 0.0, %v528
        %v530 = vpop.f32.mrb[0].mxu0
        %531 = vmatprep.mubr.f32.mxu0 0.0
        %532 = vmatmul.mubr.f32.gmra.mrb[0].mxu0 %v344
        %v533 = vpop.f32.mrb[0].mxu0
        %v534 = vadd.f32 0.0, %v533
        %v535 = vpop.f32.mrb[0].mxu0
        %536 = vmatprep.mubr.f32.mxu0 0.0
        %537 = vmatmul.mubr.f32.gmra.mrb[0].mxu0 %v347
        %v538 = vpop.f32.mrb[0].mxu0
        %v539 = vadd.f32 0.0, %v538
        %v540 = vpop.f32.mrb[0].mxu0
        %541 = vmatprep.mubr.f32.mxu0 0.0
        %542 = vmatmul.mubr.f32.gmra.mrb[0].mxu0 %v350
        %v543 = vpop.f32.mrb[0].mxu0
        %v544 = vadd.f32 0.0, %v543
        %v545 = vpop.f32.mrb[0].mxu0
        %546 = vmatprep.mubr.f32.mxu0 0.0
        %547 = vmatmul.mubr.f32.gmra.mrb[0].mxu0 %v353
        %v548 = vpop.f32.mrb[0].mxu0
        %v549 = vadd.f32 0.0, %v548
        %v550 = vpop.f32.mrb[0].mxu0
        %551 = vmatprep.mubr.f32.mxu0 0.0
        %552 = vmatmul.mubr.f32.gmra.mrb[0].mxu0 %v356
        %v553 = vpop.f32.mrb[0].mxu0
        %v554 = vadd.f32 0.0, %v553
        %v555 = vpop.f32.mrb[0].mxu0
        %556 = vmatprep.mubr.f32.mxu0 0.0
        %557 = vmatmul.mubr.f32.gmra.mrb[0].mxu0 %v359
        %v558 = vpop.f32.mrb[0].mxu0
        %v559 = vadd.f32 0.0, %v558
        %v560 = vpop.f32.mrb[0].mxu0
        %561 = vmatprep.mubr.f32.mxu0 0.0
        %562 = vmatmul.mubr.f32.gmra.mrb[0].mxu0 %v362
        %v563 = vpop.f32.mrb[0].mxu0
        %v564 = vadd.f32 0.0, %v563
        %v565 = vpop.f32.mrb[0].mxu0
        %566 = vmatprep.mubr.f32.mxu0 0.0
        %567 = vmatmul.mubr.f32.gmra.mrb[0].mxu0 %v365
        %v568 = vpop.f32.mrb[0].mxu0
        %v569 = vadd.f32 0.0, %v568
        %v570 = vpop.f32.mrb[0].mxu0
        %571 = vmatprep.mubr.f32.mxu0 0.0
        %572 = vmatmul.mubr.f32.gmra.mrb[0].mxu0 %v368
        %v573 = vpop.f32.mrb[0].mxu0
        %v574 = vadd.f32 0.0, %v573
        %v575 = vpop.f32.mrb[0].mxu0
        %576 = vmatprep.mubr.f32.mxu0 0.0
        %577 = vmatmul.mubr.f32.gmra.mrb[0].mxu0 %v371
        %v578 = vpop.f32.mrb[0].mxu0
        %v579 = vadd.f32 0.0, %v578
        %v580 = vpop.f32.mrb[0].mxu0
        %581 = vmatprep.mubr.f32.mxu0 0.0
        %582 = vmatmul.mubr.f32.gmra.mrb[0].mxu0 %v374
        %v583 = vpop.f32.mrb[0].mxu0
        %v584 = vadd.f32 0.0, %v583
        %v585 = vpop.f32.mrb[0].mxu0
        %586 = vmatprep.mubr.f32.mxu0 0.0
        %587 = vmatmul.mubr.f32.gmra.mrb[0].mxu0 %v377
        %v588 = vpop.f32.mrb[0].mxu0
        %v589 = vadd.f32 0.0, %v588
        %v590 = vpop.f32.mrb[0].mxu0
        %591 = vmatprep.mubr.f32.mxu0 0.0
        %592 = vmatmul.mubr.f32.gmra.mrb[0].mxu0 %v380
        %v593 = vpop.f32.mrb[0].mxu0
        %v594 = vadd.f32 0.0, %v593
        %v595 = vpop.f32.mrb[0].mxu0
        %596 = vmatprep.mubr.f32.mxu0 0.0
        %597 = vmatmul.mubr.f32.gmra.mrb[0].mxu0 %v383
        %v598 = vpop.f32.mrb[0].mxu0
        %v599 = vadd.f32 0.0, %v598
        %v600 = vpop.f32.mrb[0].mxu0
        %601 = vmatprep.mubr.f32.mxu0 0.0
        %602 = vmatmul.mubr.f32.gmra.mrb[0].mxu0 %v386
        %v603 = vpop.f32.mrb[0].mxu0
        %v604 = vadd.f32 0.0, %v603
        %v605 = vpop.f32.mrb[0].mxu0
        %606 = vmatprep.mubr.f32.mxu0 0.0
        %607 = vmatmul.mubr.f32.gmra.mrb[0].mxu0 %v389
        %v608 = vpop.f32.mrb[0].mxu0
        %v609 = vadd.f32 0.0, %v608
        %v610 = vpop.f32.mrb[0].mxu0
        %611 = vmatprep.mubr.f32.mxu0 0.0
        %612 = vmatmul.mubr.f32.gmra.mrb[0].mxu0 %v392
        %v613 = vpop.f32.mrb[0].mxu0
        %v614 = vadd.f32 0.0, %v613
        %v615 = vpop.f32.mrb[0].mxu0
        %616 = vmatprep.mubr.f32.mxu0 0.0
        %617 = vmatmul.mubr.f32.gmra.mrb[0].mxu0 %v395
        %v618 = vpop.f32.mrb[0].mxu0
        %v619 = vadd.f32 0.0, %v618
        %v620 = vpop.f32.mrb[0].mxu0
        %621 = vdwg.mxu0
        %v622 = vld [vmem:[#allocation7] sm:$0xff]
        %v623 = vld [vmem:[#allocation7 + $0x8] sm:$0xff]
        %v624 = vld [vmem:[#allocation8] sm:$0xff]
        %v625 = vld [vmem:[#allocation8 + $0x8] sm:$0xff]
        %v626 = vld [vmem:[#allocation8 + $0x10] sm:$0xff]
        %v627 = vld [vmem:[#allocation8 + $0x18] sm:$0xff]
        %v628 = vld [vmem:[#allocation8 + $0x20] sm:$0xff]
        %v629 = vld [vmem:[#allocation8 + $0x28] sm:$0xff]
        %v630 = vld [vmem:[#allocation8 + $0x30] sm:$0xff]
        %v631 = vld [vmem:[#allocation8 + $0x38] sm:$0xff]
        %v632 = vld [vmem:[#allocation8 + $0x40] sm:$0xff]
        %v633 = vld [vmem:[#allocation8 + $0x48] sm:$0xff]
        %v634 = vld [vmem:[#allocation8 + $0x50] sm:$0xff]
        %v635 = vld [vmem:[#allocation8 + $0x58] sm:$0xff]
        %v636 = vld [vmem:[#allocation8 + $0x60] sm:$0xff]
        %v637 = vld [vmem:[#allocation8 + $0x68] sm:$0xff]
        %v638 = vld [vmem:[#allocation8 + $0x70] sm:$0xff]
        %v639 = vld [vmem:[#allocation8 + $0x78] sm:$0xff]
        %v640 = vld [vmem:[#allocation8 + $0x80] sm:$0xff]
        %v641 = vld [vmem:[#allocation8 + $0x88] sm:$0xff]
        %v642 = vld [vmem:[#allocation8 + $0x90] sm:$0xff]
        %v643 = vld [vmem:[#allocation8 + $0x98] sm:$0xff]
        %v644 = vld [vmem:[#allocation8 + $0xa0] sm:$0xff]
        %v645 = vld [vmem:[#allocation8 + $0xa8] sm:$0xff]
        %v646 = vld [vmem:[#allocation8 + $0xb0] sm:$0xff]
        %v647 = vld [vmem:[#allocation8 + $0xb8] sm:$0xff]
        %v648 = vld [vmem:[#allocation8 + $0xc0] sm:$0xff]
        %v649 = vld [vmem:[#allocation8 + $0xc8] sm:$0xff]
        %v650 = vld [vmem:[#allocation8 + $0xd0] sm:$0xff]
        %v651 = vld [vmem:[#allocation8 + $0xd8] sm:$0xff]
        %v652 = vld [vmem:[#allocation8 + $0xe0] sm:$0xff]
        %v653 = vld [vmem:[#allocation8 + $0xe8] sm:$0xff]
        %v654 = vld [vmem:[#allocation8 + $0xf0] sm:$0xff]
        %v655 = vld [vmem:[#allocation8 + $0xf8] sm:$0xff]
        %657 = vset.pattern.permute.xlu0 0
        %658 = vperm.xlu0 %657, %v624
        %v659 = vpop.permute.xlu0 %658
        %662 = vset.pattern.permute.xlu0 0
        %663 = vperm.xlu0 %662, %v625
        %v664 = vpop.permute.xlu0 %663
        %667 = vset.pattern.permute.xlu0 0
        %668 = vperm.xlu0 %667, %v626
        %v669 = vpop.permute.xlu0 %668
        %672 = vset.pattern.permute.xlu0 0
        %673 = vperm.xlu0 %672, %v627
        %v674 = vpop.permute.xlu0 %673
        %677 = vset.pattern.permute.xlu0 0
        %678 = vperm.xlu0 %677, %v628
        %v679 = vpop.permute.xlu0 %678
        %682 = vset.pattern.permute.xlu0 0
        %683 = vperm.xlu0 %682, %v629
        %v684 = vpop.permute.xlu0 %683
        %687 = vset.pattern.permute.xlu0 0
        %688 = vperm.xlu0 %687, %v630
        %v689 = vpop.permute.xlu0 %688
        %692 = vset.pattern.permute.xlu0 0
        %693 = vperm.xlu0 %692, %v631
        %v694 = vpop.permute.xlu0 %693
        %697 = vset.pattern.permute.xlu0 0
        %698 = vperm.xlu0 %697, %v632
        %v699 = vpop.permute.xlu0 %698
        %702 = vset.pattern.permute.xlu0 0
        %703 = vperm.xlu0 %702, %v633
        %v704 = vpop.permute.xlu0 %703
        %707 = vset.pattern.permute.xlu0 0
        %708 = vperm.xlu0 %707, %v634
        %v709 = vpop.permute.xlu0 %708
        %712 = vset.pattern.permute.xlu0 0
        %713 = vperm.xlu0 %712, %v635
        %v714 = vpop.permute.xlu0 %713
        %717 = vset.pattern.permute.xlu0 0
        %718 = vperm.xlu0 %717, %v636
        %v719 = vpop.permute.xlu0 %718
        %722 = vset.pattern.permute.xlu0 0
        %723 = vperm.xlu0 %722, %v637
        %v724 = vpop.permute.xlu0 %723
        %727 = vset.pattern.permute.xlu0 0
        %728 = vperm.xlu0 %727, %v638
        %v729 = vpop.permute.xlu0 %728
        %732 = vset.pattern.permute.xlu0 0
        %733 = vperm.xlu0 %732, %v639
        %v734 = vpop.permute.xlu0 %733
        %737 = vset.pattern.permute.xlu0 0
        %738 = vperm.xlu0 %737, %v640
        %v739 = vpop.permute.xlu0 %738
        %742 = vset.pattern.permute.xlu0 0
        %743 = vperm.xlu0 %742, %v641
        %v744 = vpop.permute.xlu0 %743
        %747 = vset.pattern.permute.xlu0 0
        %748 = vperm.xlu0 %747, %v642
        %v749 = vpop.permute.xlu0 %748
        %752 = vset.pattern.permute.xlu0 0
        %753 = vperm.xlu0 %752, %v643
        %v754 = vpop.permute.xlu0 %753
        %757 = vset.pattern.permute.xlu0 0
        %758 = vperm.xlu0 %757, %v644
        %v759 = vpop.permute.xlu0 %758
        %762 = vset.pattern.permute.xlu0 0
        %763 = vperm.xlu0 %762, %v645
        %v764 = vpop.permute.xlu0 %763
        %767 = vset.pattern.permute.xlu0 0
        %768 = vperm.xlu0 %767, %v646
        %v769 = vpop.permute.xlu0 %768
        %772 = vset.pattern.permute.xlu0 0
        %773 = vperm.xlu0 %772, %v647
        %v774 = vpop.permute.xlu0 %773
        %777 = vset.pattern.permute.xlu0 0
        %778 = vperm.xlu0 %777, %v648
        %v779 = vpop.permute.xlu0 %778
        %782 = vset.pattern.permute.xlu0 0
        %783 = vperm.xlu0 %782, %v649
        %v784 = vpop.permute.xlu0 %783
        %787 = vset.pattern.permute.xlu0 0
        %788 = vperm.xlu0 %787, %v650
        %v789 = vpop.permute.xlu0 %788
        %792 = vset.pattern.permute.xlu0 0
        %793 = vperm.xlu0 %792, %v651
        %v794 = vpop.permute.xlu0 %793
        %797 = vset.pattern.permute.xlu0 0
        %798 = vperm.xlu0 %797, %v652
        %v799 = vpop.permute.xlu0 %798
        %802 = vset.pattern.permute.xlu0 0
        %803 = vperm.xlu0 %802, %v653
        %v804 = vpop.permute.xlu0 %803
        %807 = vset.pattern.permute.xlu0 0
        %808 = vperm.xlu0 %807, %v654
        %v809 = vpop.permute.xlu0 %808
        %812 = vset.pattern.permute.xlu0 0
        %813 = vperm.xlu0 %812, %v655
        %v814 = vpop.permute.xlu0 %813
        %vm816 = vcmask 130048
        %v818 = vsel %vm816, %v464, 0
        %v821 = vsel %vm816, %v469, 0
        %v824 = vsel %vm816, %v474, 0
        %v827 = vsel %vm816, %v479, 0
        %v830 = vsel %vm816, %v484, 0
        %v833 = vsel %vm816, %v489, 0
        %v836 = vsel %vm816, %v494, 0
        %v839 = vsel %vm816, %v499, 0
        %v842 = vsel %vm816, %v504, 0
        %v845 = vsel %vm816, %v509, 0
        %v848 = vsel %vm816, %v514, 0
        %v851 = vsel %vm816, %v519, 0
        %v854 = vsel %vm816, %v524, 0
        %v857 = vsel %vm816, %v529, 0
        %v860 = vsel %vm816, %v534, 0
        %v863 = vsel %vm816, %v539, 0
        %v866 = vsel %vm816, %v544, 0
        %v869 = vsel %vm816, %v549, 0
        %v872 = vsel %vm816, %v554, 0
        %v875 = vsel %vm816, %v559, 0
        %v878 = vsel %vm816, %v564, 0
        %v881 = vsel %vm816, %v569, 0
        %v884 = vsel %vm816, %v574, 0
        %v887 = vsel %vm816, %v579, 0
        %v890 = vsel %vm816, %v584, 0
        %v893 = vsel %vm816, %v589, 0
        %v896 = vsel %vm816, %v594, 0
        %v899 = vsel %vm816, %v599, 0
        %v902 = vsel %vm816, %v604, 0
        %v905 = vsel %vm816, %v609, 0
        %v908 = vsel %vm816, %v614, 0
        %v911 = vsel %vm816, %v619, 0
        %913 = vmatprep.subr.mxu0 0.0
        %914 = vmatpush1.msra.mxu0 %v622
        %915 = vmatprep.subr.mxu0 0.0
        %916 = vmatpush1.msra.mxu0 %v623
        %917 = vmatprep.subr.mxu0 0.0
        %918 = vmatpush1.msra.mxu0 0.0
        %919 = vmatprep.subr.mxu0 0.0
        %920 = vmatpush1.msra.mxu0 0.0
        %921 = vmatprep.subr.mxu0 0.0
        %922 = vmatpush1.msra.mxu0 0.0
        %923 = vmatprep.subr.mxu0 0.0
        %924 = vmatpush1.msra.mxu0 0.0
        %925 = vmatprep.subr.mxu0 0.0
        %926 = vmatpush1.msra.mxu0 0.0
        %927 = vmatprep.subr.mxu0 0.0
        %928 = vmatpush1.msra.mxu0 0.0
        %929 = vmatprep.subr.mxu0 0.0
        %930 = vmatpush1.msra.mxu0 0.0
        %931 = vmatprep.subr.mxu0 0.0
        %932 = vmatpush1.msra.mxu0 0.0
        %933 = vmatprep.subr.mxu0 0.0
        %934 = vmatpush1.msra.mxu0 0.0
        %935 = vmatprep.subr.mxu0 0.0
        %936 = vmatpush1.msra.mxu0 0.0
        %937 = vmatprep.subr.mxu0 0.0
        %938 = vmatpush1.msra.mxu0 0.0
        %939 = vmatprep.subr.mxu0 0.0
        %940 = vmatpush1.msra.mxu0 0.0
        %941 = vmatprep.subr.mxu0 0.0
        %942 = vmatpush1.msra.mxu0 0.0
        %943 = vmatprep.subr.mxu0 0.0
        %944 = vmatpush1.msra.mxu0 0.0
        %945 = vmatprep.subr.mxu0 0.0
        %946 = vmatpush1.msra.mxu0 0.0
        %947 = vmatprep.subr.mxu0 0.0
        %948 = vmatpush1.msra.mxu0 0.0
        %949 = vmatprep.subr.mxu0 0.0
        %950 = vmatpush1.msra.mxu0 0.0
        %951 = vmatprep.subr.mxu0 0.0
        %952 = vmatpush1.msra.mxu0 0.0
        %953 = vmatprep.subr.mxu0 0.0
        %954 = vmatpush1.msra.mxu0 0.0
        %955 = vmatprep.subr.mxu0 0.0
        %956 = vmatpush1.msra.mxu0 0.0
        %957 = vmatprep.subr.mxu0 0.0
        %958 = vmatpush1.msra.mxu0 0.0
        %959 = vmatprep.subr.mxu0 0.0
        %960 = vmatpush1.msra.mxu0 0.0
        %961 = vmatprep.subr.mxu0 0.0
        %962 = vmatpush1.msra.mxu0 0.0
        %963 = vmatprep.subr.mxu0 0.0
        %964 = vmatpush1.msra.mxu0 0.0
        %965 = vmatprep.subr.mxu0 0.0
        %966 = vmatpush1.msra.mxu0 0.0
        %967 = vmatprep.subr.mxu0 0.0
        %968 = vmatpush1.msra.mxu0 0.0
        %969 = vmatprep.subr.mxu0 0.0
        %970 = vmatpush1.msra.mxu0 0.0
        %971 = vmatprep.subr.mxu0 0.0
        %972 = vmatpush1.msra.mxu0 0.0
        %973 = vmatprep.subr.mxu0 0.0
        %974 = vmatpush1.msra.mxu0 0.0
        %975 = vmatprep.subr.mxu0 0.0
        %976 = vmatpush1.msra.mxu0 0.0
        %977 = vmatprep.mubr.f32.mxu0 0.0
        %978 = vmatmul.mubr.f32.gmra.mrb[0].mxu0 %v818
        %v979 = vpop.f32.mrb[0].mxu0
        %v980 = vadd.f32 %v659, %v979
        %v981 = vpop.f32.mrb[0].mxu0
        %982 = vmatprep.mubr.f32.mxu0 0.0
        %983 = vmatmul.mubr.f32.gmra.mrb[0].mxu0 %v821
        %v984 = vpop.f32.mrb[0].mxu0
        %v985 = vadd.f32 %v664, %v984
        %v986 = vpop.f32.mrb[0].mxu0
        %987 = vmatprep.mubr.f32.mxu0 0.0
        %988 = vmatmul.mubr.f32.gmra.mrb[0].mxu0 %v824
        %v989 = vpop.f32.mrb[0].mxu0
        %v990 = vadd.f32 %v669, %v989
        %v991 = vpop.f32.mrb[0].mxu0
        %992 = vmatprep.mubr.f32.mxu0 0.0
        %993 = vmatmul.mubr.f32.gmra.mrb[0].mxu0 %v827
        %v994 = vpop.f32.mrb[0].mxu0
        %v995 = vadd.f32 %v674, %v994
        %v996 = vpop.f32.mrb[0].mxu0
        %997 = vmatprep.mubr.f32.mxu0 0.0
        %998 = vmatmul.mubr.f32.gmra.mrb[0].mxu0 %v830
        %v999 = vpop.f32.mrb[0].mxu0
        %v1000 = vadd.f32 %v679, %v999
        %v1001 = vpop.f32.mrb[0].mxu0
        %1002 = vmatprep.mubr.f32.mxu0 0.0
        %1003 = vmatmul.mubr.f32.gmra.mrb[0].mxu0 %v833
        %v1004 = vpop.f32.mrb[0].mxu0
        %v1005 = vadd.f32 %v684, %v1004
        %v1006 = vpop.f32.mrb[0].mxu0
        %1007 = vmatprep.mubr.f32.mxu0 0.0
        %1008 = vmatmul.mubr.f32.gmra.mrb[0].mxu0 %v836
        %v1009 = vpop.f32.mrb[0].mxu0
        %v1010 = vadd.f32 %v689, %v1009
        %v1011 = vpop.f32.mrb[0].mxu0
        %1012 = vmatprep.mubr.f32.mxu0 0.0
        %1013 = vmatmul.mubr.f32.gmra.mrb[0].mxu0 %v839
        %v1014 = vpop.f32.mrb[0].mxu0
        %v1015 = vadd.f32 %v694, %v1014
        %v1016 = vpop.f32.mrb[0].mxu0
        %1017 = vmatprep.mubr.f32.mxu0 0.0
        %1018 = vmatmul.mubr.f32.gmra.mrb[0].mxu0 %v842
        %v1019 = vpop.f32.mrb[0].mxu0
        %v1020 = vadd.f32 %v699, %v1019
        %v1021 = vpop.f32.mrb[0].mxu0
        %1022 = vmatprep.mubr.f32.mxu0 0.0
        %1023 = vmatmul.mubr.f32.gmra.mrb[0].mxu0 %v845
        %v1024 = vpop.f32.mrb[0].mxu0
        %v1025 = vadd.f32 %v704, %v1024
        %v1026 = vpop.f32.mrb[0].mxu0
        %1027 = vmatprep.mubr.f32.mxu0 0.0
        %1028 = vmatmul.mubr.f32.gmra.mrb[0].mxu0 %v848
        %v1029 = vpop.f32.mrb[0].mxu0
        %v1030 = vadd.f32 %v709, %v1029
        %v1031 = vpop.f32.mrb[0].mxu0
        %1032 = vmatprep.mubr.f32.mxu0 0.0
        %1033 = vmatmul.mubr.f32.gmra.mrb[0].mxu0 %v851
        %v1034 = vpop.f32.mrb[0].mxu0
        %v1035 = vadd.f32 %v714, %v1034
        %v1036 = vpop.f32.mrb[0].mxu0
        %1037 = vmatprep.mubr.f32.mxu0 0.0
        %1038 = vmatmul.mubr.f32.gmra.mrb[0].mxu0 %v854
        %v1039 = vpop.f32.mrb[0].mxu0
        %v1040 = vadd.f32 %v719, %v1039
        %v1041 = vpop.f32.mrb[0].mxu0
        %1042 = vmatprep.mubr.f32.mxu0 0.0
        %1043 = vmatmul.mubr.f32.gmra.mrb[0].mxu0 %v857
        %v1044 = vpop.f32.mrb[0].mxu0
        %v1045 = vadd.f32 %v724, %v1044
        %v1046 = vpop.f32.mrb[0].mxu0
        %1047 = vmatprep.mubr.f32.mxu0 0.0
        %1048 = vmatmul.mubr.f32.gmra.mrb[0].mxu0 %v860
        %v1049 = vpop.f32.mrb[0].mxu0
        %v1050 = vadd.f32 %v729, %v1049
        %v1051 = vpop.f32.mrb[0].mxu0
        %1052 = vmatprep.mubr.f32.mxu0 0.0
        %1053 = vmatmul.mubr.f32.gmra.mrb[0].mxu0 %v863
        %v1054 = vpop.f32.mrb[0].mxu0
        %v1055 = vadd.f32 %v734, %v1054
        %v1056 = vpop.f32.mrb[0].mxu0
        %1057 = vmatprep.mubr.f32.mxu0 0.0
        %1058 = vmatmul.mubr.f32.gmra.mrb[0].mxu0 %v866
        %v1059 = vpop.f32.mrb[0].mxu0
        %v1060 = vadd.f32 %v739, %v1059
        %v1061 = vpop.f32.mrb[0].mxu0
        %1062 = vmatprep.mubr.f32.mxu0 0.0
        %1063 = vmatmul.mubr.f32.gmra.mrb[0].mxu0 %v869
        %v1064 = vpop.f32.mrb[0].mxu0
        %v1065 = vadd.f32 %v744, %v1064
        %v1066 = vpop.f32.mrb[0].mxu0
        %1067 = vmatprep.mubr.f32.mxu0 0.0
        %1068 = vmatmul.mubr.f32.gmra.mrb[0].mxu0 %v872
        %v1069 = vpop.f32.mrb[0].mxu0
        %v1070 = vadd.f32 %v749, %v1069
        %v1071 = vpop.f32.mrb[0].mxu0
        %1072 = vmatprep.mubr.f32.mxu0 0.0
        %1073 = vmatmul.mubr.f32.gmra.mrb[0].mxu0 %v875
        %v1074 = vpop.f32.mrb[0].mxu0
        %v1075 = vadd.f32 %v754, %v1074
        %v1076 = vpop.f32.mrb[0].mxu0
        %1077 = vmatprep.mubr.f32.mxu0 0.0
        %1078 = vmatmul.mubr.f32.gmra.mrb[0].mxu0 %v878
        %v1079 = vpop.f32.mrb[0].mxu0
        %v1080 = vadd.f32 %v759, %v1079
        %v1081 = vpop.f32.mrb[0].mxu0
        %1082 = vmatprep.mubr.f32.mxu0 0.0
        %1083 = vmatmul.mubr.f32.gmra.mrb[0].mxu0 %v881
        %v1084 = vpop.f32.mrb[0].mxu0
        %v1085 = vadd.f32 %v764, %v1084
        %v1086 = vpop.f32.mrb[0].mxu0
        %1087 = vmatprep.mubr.f32.mxu0 0.0
        %1088 = vmatmul.mubr.f32.gmra.mrb[0].mxu0 %v884
        %v1089 = vpop.f32.mrb[0].mxu0
        %v1090 = vadd.f32 %v769, %v1089
        %v1091 = vpop.f32.mrb[0].mxu0
        %1092 = vmatprep.mubr.f32.mxu0 0.0
        %1093 = vmatmul.mubr.f32.gmra.mrb[0].mxu0 %v887
        %v1094 = vpop.f32.mrb[0].mxu0
        %v1095 = vadd.f32 %v774, %v1094
        %v1096 = vpop.f32.mrb[0].mxu0
        %1097 = vmatprep.mubr.f32.mxu0 0.0
        %1098 = vmatmul.mubr.f32.gmra.mrb[0].mxu0 %v890
        %v1099 = vpop.f32.mrb[0].mxu0
        %v1100 = vadd.f32 %v779, %v1099
        %v1101 = vpop.f32.mrb[0].mxu0
        %1102 = vmatprep.mubr.f32.mxu0 0.0
        %1103 = vmatmul.mubr.f32.gmra.mrb[0].mxu0 %v893
        %v1104 = vpop.f32.mrb[0].mxu0
        %v1105 = vadd.f32 %v784, %v1104
        %v1106 = vpop.f32.mrb[0].mxu0
        %1107 = vmatprep.mubr.f32.mxu0 0.0
        %1108 = vmatmul.mubr.f32.gmra.mrb[0].mxu0 %v896
        %v1109 = vpop.f32.mrb[0].mxu0
        %v1110 = vadd.f32 %v789, %v1109
        %v1111 = vpop.f32.mrb[0].mxu0
        %1112 = vmatprep.mubr.f32.mxu0 0.0
        %1113 = vmatmul.mubr.f32.gmra.mrb[0].mxu0 %v899
        %v1114 = vpop.f32.mrb[0].mxu0
        %v1115 = vadd.f32 %v794, %v1114
        %v1116 = vpop.f32.mrb[0].mxu0
        %1117 = vmatprep.mubr.f32.mxu0 0.0
        %1118 = vmatmul.mubr.f32.gmra.mrb[0].mxu0 %v902
        %v1119 = vpop.f32.mrb[0].mxu0
        %v1120 = vadd.f32 %v799, %v1119
        %v1121 = vpop.f32.mrb[0].mxu0
        %1122 = vmatprep.mubr.f32.mxu0 0.0
        %1123 = vmatmul.mubr.f32.gmra.mrb[0].mxu0 %v905
        %v1124 = vpop.f32.mrb[0].mxu0
        %v1125 = vadd.f32 %v804, %v1124
        %v1126 = vpop.f32.mrb[0].mxu0
        %1127 = vmatprep.mubr.f32.mxu0 0.0
        %1128 = vmatmul.mubr.f32.gmra.mrb[0].mxu0 %v908
        %v1129 = vpop.f32.mrb[0].mxu0
        %v1130 = vadd.f32 %v809, %v1129
        %v1131 = vpop.f32.mrb[0].mxu0
        %1132 = vmatprep.mubr.f32.mxu0 0.0
        %1133 = vmatmul.mubr.f32.gmra.mrb[0].mxu0 %v911
        %v1134 = vpop.f32.mrb[0].mxu0
        %v1135 = vadd.f32 %v814, %v1134
        %v1136 = vpop.f32.mrb[0].mxu0
        %1137 = vdwg.mxu0
        %vm1138 = vcmask 261120
        %1139 = vst.msk [vmem:[%s259] sm:$0xff] %vm1138, %v980
        %1140 = vst.msk [vmem:[%s259 + $0x8] sm:$0xff] %vm1138, %v985
        %1141 = vst.msk [vmem:[%s259 + $0x10] sm:$0xff] %vm1138, %v990
        %1142 = vst.msk [vmem:[%s259 + $0x18] sm:$0xff] %vm1138, %v995
        %1143 = vst.msk [vmem:[%s259 + $0x20] sm:$0xff] %vm1138, %v1000
        %1144 = vst.msk [vmem:[%s259 + $0x28] sm:$0xff] %vm1138, %v1005
        %1145 = vst.msk [vmem:[%s259 + $0x30] sm:$0xff] %vm1138, %v1010
        %1146 = vst.msk [vmem:[%s259 + $0x38] sm:$0xff] %vm1138, %v1015
        %1147 = vst.msk [vmem:[%s259 + $0x40] sm:$0xff] %vm1138, %v1020
        %1148 = vst.msk [vmem:[%s259 + $0x48] sm:$0xff] %vm1138, %v1025
        %1149 = vst.msk [vmem:[%s259 + $0x50] sm:$0xff] %vm1138, %v1030
        %1150 = vst.msk [vmem:[%s259 + $0x58] sm:$0xff] %vm1138, %v1035
        %1151 = vst.msk [vmem:[%s259 + $0x60] sm:$0xff] %vm1138, %v1040
        %1152 = vst.msk [vmem:[%s259 + $0x68] sm:$0xff] %vm1138, %v1045
        %1153 = vst.msk [vmem:[%s259 + $0x70] sm:$0xff] %vm1138, %v1050
        %1154 = vst.msk [vmem:[%s259 + $0x78] sm:$0xff] %vm1138, %v1055
        %1155 = vst.msk [vmem:[%s259 + $0x80] sm:$0xff] %vm1138, %v1060
        %1156 = vst.msk [vmem:[%s259 + $0x88] sm:$0xff] %vm1138, %v1065
        %1157 = vst.msk [vmem:[%s259 + $0x90] sm:$0xff] %vm1138, %v1070
        %1158 = vst.msk [vmem:[%s259 + $0x98] sm:$0xff] %vm1138, %v1075
        %1159 = vst.msk [vmem:[%s259 + $0xa0] sm:$0xff] %vm1138, %v1080
        %1160 = vst.msk [vmem:[%s259 + $0xa8] sm:$0xff] %vm1138, %v1085
        %1161 = vst.msk [vmem:[%s259 + $0xb0] sm:$0xff] %vm1138, %v1090
        %1162 = vst.msk [vmem:[%s259 + $0xb8] sm:$0xff] %vm1138, %v1095
        %1163 = vst.msk [vmem:[%s259 + $0xc0] sm:$0xff] %vm1138, %v1100
        %1164 = vst.msk [vmem:[%s259 + $0xc8] sm:$0xff] %vm1138, %v1105
        %1165 = vst.msk [vmem:[%s259 + $0xd0] sm:$0xff] %vm1138, %v1110
        %1166 = vst.msk [vmem:[%s259 + $0xd8] sm:$0xff] %vm1138, %v1115
        %1167 = vst.msk [vmem:[%s259 + $0xe0] sm:$0xff] %vm1138, %v1120
        %1168 = vst.msk [vmem:[%s259 + $0xe8] sm:$0xff] %vm1138, %v1125
        %1169 = vst.msk [vmem:[%s259 + $0xf0] sm:$0xff] %vm1138, %v1130
        %1170 = vst.msk [vmem:[%s259 + $0xf8] sm:$0xff] %vm1138, %v1135
        %s1171 = sand.u32 %s120, 1
        %s1172 = scalar_lea.sflag [#allocation4], %s1171
        %s1173 = sand.u32 %s120, 1
        %s1174 = smul.addr %s1173, 256
        %s1175 = scalar_lea.vmem [#allocation10], %s1174
        // Predicated region
        $region53: #{forward.1} parent=35 // pred_check
          %p1176 = pneg %p130
        $region54: #{forward.1} parent=35 // pred_check_branch
          %1178 = sbr.rel (%p1176) target = $region56
        $region55: #{forward.1} parent=35 // pred_region
          %s1180 = ssub.s32 4096, 4096
          %1181 = vsyncadd %s1172, %s1180
          %s1182 = smul.addr %s23, 32
          %s1183 = smul.addr %s1182, 128
          %s1184 = scalar_lea.hbm %s4, %s1183
          %s1185 = sshll.u32 %s1175, 4
          %s1186 = int_to_ptr.vmem [resolvable:$true] %s1185
          %1191 = dma.vmem_to_hbm [thread:$0]  %s1186, 4096, %s1184, %s1172, 128, 128, 8
        $region56: #{forward.1} parent=35 // pred_fallthru
          _
      $region36: #{forward.1} parent=5 // pred_fallthru
        _
      %p1192 = scmp.le.s32.totalorder 2, %s18
      // Predicated region
      $region57: #{forward.1} parent=5 // pred_check
        %p1193 = pneg %p1192
      $region58: #{forward.1} parent=5 // pred_check_branch
        %1195 = sbr.rel (%p1193) target = $region60
      $region59: #{forward.1} parent=5 // pred_region
        %s1196 = ssub.s32 %s18, 2
        // Predicated region
        $region61: #{forward.1} parent=59 // pred_check
          %p1197 = pneg %p136
        $region62: #{forward.1} parent=59 // pred_check_branch
          %1199 = sbr.rel (%p1197) target = $region64
        $region63: #{forward.1} parent=59 // pred_region
          %s1200 = sand.u32 %s121, 1
          %s1201 = scalar_lea.sflag [#allocation4], %s1200
          %s1202 = sand.u32 %s121, 1
          %s1203 = smul.addr %s1202, 256
          %s1204 = scalar_lea.vmem [#allocation10], %s1203
          %1205 = dma.done %s1201, 4096
        $region64: #{forward.1} parent=59 // pred_fallthru
          _
      $region60: #{forward.1} parent=5 // pred_fallthru
        _
    $region6: #{forward.1} parent=1 // loop_footer
      %s22 = sadd.s32 1, %s18
    $region7: #{forward.1} parent=1 // loop_footer_branch
      %17 = sbr.rel target = $region3
    $region8: #{forward.1} parent=1 // loop_exit
      _
    %1206 = vsyncpa [#allocation3], 1
    %s1207 = scalar_lea.sflag [#allocation3], 1
    %1208 = vsyncpa %s1207, 1
    %1209 = vsyncpa [#allocation6], 1
    %1210 = vsyncpa [#allocation9], 1
    %1211 = vsyncpa [#allocation4], 1
    %s1212 = scalar_lea.sflag [#allocation4], 1
    %1213 = vsyncpa %s1212, 1

</llo_original>
